<compile_context>
chip_gen: v6e
topology: v6e:2x2x1
jax: 0.10.0
libtpu: 0.0.40
codegen_flags: <defaults>
</compile_context>

<pallas_src>
import functools

import jax
import jax.numpy as jnp
from jax.experimental import pallas as pl
from jax.experimental.pallas import tpu as pltpu


# --------------------------------------------------------------------- helpers

def _round_up(n, m):
    return ((n + m - 1) // m) * m


def _choose_block_batch(batch, block_batch=None, max_block=2048):
    """Largest reasonable batch tile: multiple of 128, >=2 grid steps when the
    batch allows it (v7x has 2 TensorCores), capped so double-buffered tiles stay
    tiny relative to the scoped VMEM budget."""
    if block_batch is not None:
        return int(block_batch)
    half = _round_up(max(1, -(-batch // 2)), 128)
    return int(max(128, min(max_block, half)))


def _pad_rows(a, rows):
    """Zero-pad the leading (batch) axis up to `rows`; no-op if already aligned."""
    if a.shape[0] == rows:
        return a
    pad = ((0, rows - a.shape[0]),) + ((0, 0),) * (a.ndim - 1)
    return jnp.pad(a, pad)


def _prep_params(w1, b1, w2, b2):
    w1 = jnp.asarray(w1)
    w2 = jnp.asarray(w2)
    b1 = jnp.asarray(b1).reshape(1, -1)   # accept PyTorch-style 1-D biases
    b2 = jnp.asarray(b2).reshape(1, -1)
    return w1, b1, w2, b2


def _mlp_f32(x, w1, b1, w2, b2):
    """Linear -> ReLU -> Linear, f32 accumulation on the MXU, bias/ReLU on the VPU."""
    h = jnp.dot(x.astype(jnp.float32), w1.astype(jnp.float32),
                preferred_element_type=jnp.float32)
    h = jnp.maximum(h + b1.astype(jnp.float32), 0.0)
    out = jnp.dot(h, w2.astype(jnp.float32), preferred_element_type=jnp.float32)
    return out + b2.astype(jnp.float32)


# --------------------------------------------------------------------- kernels

def _fwd_kernel(x_ref, w1_ref, b1_ref, w2_ref, b2_ref, o_ref):
    pred = _mlp_f32(x_ref[...], w1_ref[...], b1_ref[...], w2_ref[...], b2_ref[...])
    o_ref[...] = pred.astype(o_ref.dtype)


def _energy_kernel(x_ref, y_ref, w1_ref, b1_ref, w2_ref, b2_ref, e_ref):
    pred = _mlp_f32(x_ref[...], w1_ref[...], b1_ref[...], w2_ref[...], b2_ref[...])
    diff = pred - y_ref[...].astype(jnp.float32)
    e_ref[...] = (0.5 * diff * diff).astype(e_ref.dtype)


def _energy_sum_kernel(x_ref, y_ref, w1_ref, b1_ref, w2_ref, b2_ref, s_ref, *,
                       batch, block_batch):
    """Per-proposal total energy.  Grid = (proposal, batch_tile); the output block
    (1,1,1) is resident across the batch axis and accumulated in place."""
    j = pl.program_id(1)

    @pl.when(j == 0)
    def _():
        s_ref[...] = jnp.zeros_like(s_ref)

    pred = _mlp_f32(x_ref[...], w1_ref[0], b1_ref[0], w2_ref[0], b2_ref[0])
    diff = pred - y_ref[...].astype(jnp.float32)
    e = 0.5 * diff * diff

    # Mask zero-padded batch rows out of the reduction.
    valid = batch - j * block_batch
    row = jax.lax.broadcasted_iota(jnp.int32, e.shape, 0)
    e = jnp.where(row < valid, e, 0.0)

    s_ref[...] += jnp.sum(e)


# -------------------------------------------------------------------- wrappers

def prob_model_forward(x, w1, b1, w2, b2, *, block_batch=None):
    """ProbModel.forward(x) = Linear -> ReLU -> Linear, tiled over the batch."""
    w1, b1, w2, b2 = _prep_params(w1, b1, w2, b2)
    batch, in_dim = x.shape
    hidden, out_dim = w2.shape

    bb = _choose_block_batch(batch, block_batch)
    batch_p = _round_up(batch, bb)
    grid = (batch_p // bb,)
    x_p = _pad_rows(x, batch_p)

    out = pl.pallas_call(
        _fwd_kernel,
        out_shape=jax.ShapeDtypeStruct((batch_p, out_dim), x.dtype),
        grid=grid,
        in_specs=[
            pl.BlockSpec((bb, in_dim), lambda i: (i, 0)),
            # Grid-invariant blocks: fetched once, VMEM-resident across the grid.
            pl.BlockSpec((in_dim, hidden), lambda i: (0, 0)),
            pl.BlockSpec((1, hidden), lambda i: (0, 0)),
            pl.BlockSpec((hidden, out_dim), lambda i: (0, 0)),
            pl.BlockSpec((1, out_dim), lambda i: (0, 0)),
        ],
        out_specs=pl.BlockSpec((bb, out_dim), lambda i: (i, 0)),
        compiler_params=pltpu.CompilerParams(dimension_semantics=("parallel",)),
    )(x_p, w1, b1, w2, b2)
    return out[:batch]


def prob_model_energy(x, y, w1, b1, w2, b2, *, block_batch=None):
    """ProbModel.energy(x, y) = 0.5 * (model(x) - y)**2, fused (no HBM round-trip
    of the prediction, no lane padding of y or of the energy output)."""
    w1, b1, w2, b2 = _prep_params(w1, b1, w2, b2)
    batch, in_dim = x.shape
    hidden, out_dim = w2.shape

    bb = _choose_block_batch(batch, block_batch)
    batch_p = _round_up(batch, bb)
    grid = (batch_p // bb,)
    x_p = _pad_rows(x, batch_p)
    y_p = _pad_rows(y, batch_p)

    e = pl.pallas_call(
        _energy_kernel,
        out_shape=jax.ShapeDtypeStruct((batch_p, out_dim), jnp.float32),
        grid=grid,
        in_specs=[
            pl.BlockSpec((bb, in_dim), lambda i: (i, 0)),
            pl.BlockSpec((bb, out_dim), lambda i: (i, 0)),
            pl.BlockSpec((in_dim, hidden), lambda i: (0, 0)),
            pl.BlockSpec((1, hidden), lambda i: (0, 0)),
            pl.BlockSpec((hidden, out_dim), lambda i: (0, 0)),
            pl.BlockSpec((1, out_dim), lambda i: (0, 0)),
        ],
        out_specs=pl.BlockSpec((bb, out_dim), lambda i: (i, 0)),
        compiler_params=pltpu.CompilerParams(dimension_semantics=("parallel",)),
    )(x_p, y_p, w1, b1, w2, b2)
    return e[:batch]


def prob_model_energy_sum(x, y, W1, B1, W2, B2, *, block_batch=None):
    """sum_i 0.5*(model_p(x_i) - y_i)**2 for P stacked proposals in ONE pallas_call.

    W1:(P,in,hidden)  B1:(P,hidden) or (P,1,hidden)
    W2:(P,hidden,out) B2:(P,out)    or (P,1,out)
    Returns (P,) f32 — exactly what an MH acceptance test needs.  Pass w[None]
    for a single model."""
    x = jnp.asarray(x)
    y = jnp.asarray(y)
    W1 = jnp.asarray(W1)
    W2 = jnp.asarray(W2)
    n_prop, in_dim, hidden = W1.shape
    out_dim = W2.shape[-1]
    B1 = jnp.asarray(B1).reshape(n_prop, 1, hidden)
    B2 = jnp.asarray(B2).reshape(n_prop, 1, out_dim)

    batch = x.shape[0]
    bb = _choose_block_batch(batch, block_batch)
    batch_p = _round_up(batch, bb)
    n_tiles = batch_p // bb
    x_p = _pad_rows(x, batch_p)
    y_p = _pad_rows(y, batch_p)

    kernel = functools.partial(_energy_sum_kernel, batch=batch, block_batch=bb)
    out = pl.pallas_call(
        kernel,
        out_shape=jax.ShapeDtypeStruct((n_prop, 1, 1), jnp.float32),
        grid=(n_prop, n_tiles),
        in_specs=[
            # x / y are shared across proposals; weights are blocked per proposal.
            pl.BlockSpec((bb, in_dim), lambda p, j: (j, 0)),
            pl.BlockSpec((bb, out_dim), lambda p, j: (j, 0)),
            pl.BlockSpec((1, in_dim, hidden), lambda p, j: (p, 0, 0)),
            pl.BlockSpec((1, 1, hidden), lambda p, j: (p, 0, 0)),
            pl.BlockSpec((1, hidden, out_dim), lambda p, j: (p, 0, 0)),
            pl.BlockSpec((1, 1, out_dim), lambda p, j: (p, 0, 0)),
        ],
        out_specs=pl.BlockSpec((1, 1, 1), lambda p, j: (p, 0, 0)),
        compiler_params=pltpu.CompilerParams(
            dimension_semantics=("parallel", "arbitrary")),
    )(x_p, y_p, W1, B1, W2, B2)
    return out.reshape(n_prop)


# ------------------------------------------------------------------------ demo

if __name__ == "__main__":
    # batch chosen non-tile-aligned on purpose to exercise the row padding/masking;
    # adaptive tiling gives block_batch=256 -> a 2-step "parallel" batch grid.
    batch, in_dim, hidden, out_dim, n_prop = 500, 16, 32, 1, 4

    key = jax.random.PRNGKey(0)
    kx, ky, kw = jax.random.split(key, 3)
    x = jax.random.normal(kx, (batch, in_dim), dtype=jnp.float32)
    y = jax.random.normal(ky, (batch, out_dim), dtype=jnp.float32)

    def init_params(k):
        k1, k2, k3, k4 = jax.random.split(k, 4)
        s1 = 1.0 / in_dim ** 0.5
        s2 = 1.0 / hidden ** 0.5
        w1 = jax.random.uniform(k1, (in_dim, hidden), jnp.float32, -s1, s1)
        b1 = jax.random.uniform(k2, (hidden,), jnp.float32, -s1, s1)
        w2 = jax.random.uniform(k3, (hidden, out_dim), jnp.float32, -s2, s2)
        b2 = jax.random.uniform(k4, (out_dim,), jnp.float32, -s2, s2)
        return w1, b1, w2, b2

    props = [init_params(k) for k in jax.random.split(kw, n_prop)]

    def ref_forward(x, w1, b1, w2, b2):
        return jnp.maximum(x @ w1 + b1.reshape(1, -1), 0.0) @ w2 + b2.reshape(1, -1)

    # --- forward ---------------------------------------------------------------
    w1, b1, w2, b2 = props[0]
    out = jax.block_until_ready(prob_model_forward(x, w1, b1, w2, b2))
    ref = ref_forward(x, w1, b1, w2, b2)
    assert out.shape == (batch, out_dim)
    assert jnp.allclose(out, ref, atol=1e-4, rtol=1e-4)

    # --- fused elementwise energy ----------------------------------------------
    e = jax.block_until_ready(prob_model_energy(x, y, w1, b1, w2, b2))
    assert e.shape == (batch, out_dim)
    assert jnp.allclose(e, 0.5 * (ref - y) ** 2, atol=1e-4, rtol=1e-4)

    # --- proposal-batched reduced energy (one pallas_call for all proposals) ----
    W1 = jnp.stack([p[0] for p in props])
    B1 = jnp.stack([p[1] for p in props])
    W2 = jnp.stack([p[2] for p in props])
    B2 = jnp.stack([p[3] for p in props])
    sums = jax.block_until_ready(prob_model_energy_sum(x, y, W1, B1, W2, B2))
    ref_sums = jnp.stack(
        [jnp.sum(0.5 * (ref_forward(x, *p) - y) ** 2) for p in props])
    assert sums.shape == (n_prop,)
    assert jnp.allclose(sums, ref_sums, rtol=1e-3, atol=1e-2)

    print("KERNEL_OK")
</pallas_src>

<mosaic_0001>
module attributes {stable_mosaic.version = 11 : i64} {
  func.func @_fwd_kernel(%arg0: i32, %arg1: memref<256x16xf32, #tpu.memory_space<vmem>>, %arg2: memref<16x32xf32, #tpu.memory_space<vmem>>, %arg3: memref<1x32xf32, #tpu.memory_space<vmem>>, %arg4: memref<32x1xf32, #tpu.memory_space<vmem>>, %arg5: memref<1x1xf32, #tpu.memory_space<vmem>>, %arg6: memref<256x1xf32, #tpu.memory_space<vmem>>) attributes {dimension_semantics = [#tpu.dimension_semantics<parallel>], iteration_bounds = array<i64: 2>, scalar_prefetch = 0 : i64, scratch_operands = 0 : i64, tpu.core_type = #tpu.core_type<tc>, window_params = [{transform_indices = @transform_0, window_bounds = array<i64: 256, 16>}, {pipeline_mode = #tpu.pipeline_mode<synchronous>, transform_indices = @transform_1, window_bounds = array<i64: 16, 32>}, {pipeline_mode = #tpu.pipeline_mode<synchronous>, transform_indices = @transform_2, window_bounds = array<i64: 1, 32>}, {pipeline_mode = #tpu.pipeline_mode<synchronous>, transform_indices = @transform_3, window_bounds = array<i64: 32, 1>}, {pipeline_mode = #tpu.pipeline_mode<synchronous>, transform_indices = @transform_4, window_bounds = array<i64: 1, 1>}, {transform_indices = @transform_5, window_bounds = array<i64: 256, 1>}]} {
    %c0 = arith.constant 0 : index
    %c0_0 = arith.constant 0 : index
    %0 = vector.load %arg1[%c0, %c0_0] : memref<256x16xf32, #tpu.memory_space<vmem>>, vector<256x16xf32>
    %c0_1 = arith.constant 0 : index
    %c0_2 = arith.constant 0 : index
    %1 = vector.load %arg2[%c0_1, %c0_2] : memref<16x32xf32, #tpu.memory_space<vmem>>, vector<16x32xf32>
    %c0_3 = arith.constant 0 : index
    %c0_4 = arith.constant 0 : index
    %2 = vector.load %arg3[%c0_3, %c0_4] : memref<1x32xf32, #tpu.memory_space<vmem>>, vector<1x32xf32>
    %c0_5 = arith.constant 0 : index
    %c0_6 = arith.constant 0 : index
    %3 = vector.load %arg4[%c0_5, %c0_6] : memref<32x1xf32, #tpu.memory_space<vmem>>, vector<32x1xf32>
    %c0_7 = arith.constant 0 : index
    %c0_8 = arith.constant 0 : index
    %4 = vector.load %arg5[%c0_7, %c0_8] : memref<1x1xf32, #tpu.memory_space<vmem>>, vector<1x1xf32>
    %cst = arith.constant dense<0.000000e+00> : vector<256x32xf32>
    %5 = tpu.matmul %0, %1, %cst {dimension_numbers = #tpu.dot_dimension_numbers<[1], [0], [0], [1], [0, 0, 1, 1], [], []>} : vector<256x16xf32>, vector<16x32xf32>, vector<256x32xf32> -> vector<256x32xf32>
    %6 = vector.broadcast %2 : vector<1x32xf32> to vector<256x32xf32>
    %7 = arith.addf %5, %6 : vector<256x32xf32>
    %cst_9 = arith.constant 0.000000e+00 : f32
    %8 = vector.broadcast %cst_9 : f32 to vector<256x32xf32>
    %9 = arith.maximumf %7, %8 : vector<256x32xf32>
    %cst_10 = arith.constant dense<0.000000e+00> : vector<256x1xf32>
    %10 = tpu.matmul %9, %3, %cst_10 {dimension_numbers = #tpu.dot_dimension_numbers<[1], [0], [0], [1], [0, 0, 1, 1], [], []>} : vector<256x32xf32>, vector<32x1xf32>, vector<256x1xf32> -> vector<256x1xf32>
    %11 = vector.broadcast %4 : vector<1x1xf32> to vector<256x1xf32>
    %12 = arith.addf %10, %11 : vector<256x1xf32>
    %c0_11 = arith.constant 0 : index
    %c0_12 = arith.constant 0 : index
    %13 = vector.load %arg6[%c0_11, %c0_12] : memref<256x1xf32, #tpu.memory_space<vmem>>, vector<256x1xf32>
    tpu.vector_store %arg6[%c0_11, %c0_12], %12 {strides = array<i32>} : memref<256x1xf32, #tpu.memory_space<vmem>>, vector<256x1xf32>,
    return
  }
  func.func @transform_0(%arg0: i32) -> (i32, i32) {
    %c0_i32 = arith.constant 0 : i32
    %c0_i32_0 = arith.constant 0 : i32
    return %arg0, %c0_i32 : i32, i32
  }
  func.func @transform_1(%arg0: i32) -> (i32, i32) {
    %c0_i32 = arith.constant 0 : i32
    %c0_i32_0 = arith.constant 0 : i32
    %c0_i32_1 = arith.constant 0 : i32
    return %c0_i32, %c0_i32_0 : i32, i32
  }
  func.func @transform_2(%arg0: i32) -> (i32, i32) {
    %c0_i32 = arith.constant 0 : i32
    %c0_i32_0 = arith.constant 0 : i32
    %c0_i32_1 = arith.constant 0 : i32
    return %c0_i32, %c0_i32_0 : i32, i32
  }
  func.func @transform_3(%arg0: i32) -> (i32, i32) {
    %c0_i32 = arith.constant 0 : i32
    %c0_i32_0 = arith.constant 0 : i32
    %c0_i32_1 = arith.constant 0 : i32
    return %c0_i32, %c0_i32_0 : i32, i32
  }
  func.func @transform_4(%arg0: i32) -> (i32, i32) {
    %c0_i32 = arith.constant 0 : i32
    %c0_i32_0 = arith.constant 0 : i32
    %c0_i32_1 = arith.constant 0 : i32
    return %c0_i32, %c0_i32_0 : i32, i32
  }
  func.func @transform_5(%arg0: i32) -> (i32, i32) {
    %c0_i32 = arith.constant 0 : i32
    %c0_i32_0 = arith.constant 0 : i32
    return %arg0, %c0_i32 : i32, i32
  }
}

</mosaic_0001>

<llo_original>
// kernel: tpu_custom_call.1
$region0: #{tpu_custom_call.1}
  #allocation0 [shape = 'u32[]', space=smem, size = 0x4, offset = 0x4, fixed_abs, tag = 'smem constant byte address 0x4 - core index']
  #allocation1 [shape = 'u32[144,128]{1,0:T(1,128)}', space=vmem, size = 0x12000, scoped, tag = 'internal scratch']
  #allocation2 [shape = 'f32[1,1]{1,0:T(1,128)S(1)}', space=vmem, size = 0x200, scoped, tag = 'scoped memory for tpu_custom_call.1']
  %s0 = inlined_call_operand.vmem [shape: f32[512,16], index: 0, kind: input, shape index: {}]
  %s1 = inlined_call_operand.vmem [shape: f32[16,32], index: 1, kind: input, shape index: {}]
  %s2 = inlined_call_operand.vmem [shape: f32[1,32], index: 2, kind: input, shape index: {}]
  %s3 = inlined_call_operand.vmem [shape: f32[32,1], index: 3, kind: input, shape index: {}]
  %s4 = inlined_call_operand.<no memory space> [shape: f32[1,1], index: 4, kind: input, shape index: {}]
  %s5 = inlined_call_operand.vmem [shape: f32[512,1], index: 5, kind: output, shape index: {}]
  %s6 = sld [smem:[#allocation0]]
  $region53: #{tpu_custom_call.1} parent=0
    _
  %s8 = ssub.s32 1, %s6
  %s9 = scalar_select 0, %s8, %s6
  %v10 = vstv %s4
  %11 = vst [vmem:[#allocation2] sm:$0x1] %v10
  loop: start=0, step=1, limit=4
  $region2: #{tpu_custom_call.1} parent=0 // loop_pre_header
    _
  $region3: #{tpu_custom_call.1} parent=0 // loop_header
    %s13 = sphi 0, %s17
    %p14 = scmp.ge.s32.totalorder %s13, 4
    %s23 = sphi 0, %s25
    %s26 = sphi 0, %s23
    %s27 = sphi 0, %s26
    %s43 = sphi 0, %s27
    %s47 = sphi 0, %s47
    %s49 = sphi 0, %s47
    %s50 = sphi 0, %s49
    %s64 = sphi 0, %s50
    %s68 = sphi 0, %s68
    %s70 = sphi 0, %s68
    %s71 = sphi 0, %s70
    %s85 = sphi 0, %s71
    %s89 = sphi 0, %s89
    %s91 = sphi 0, %s89
    %s92 = sphi 0, %s91
    %s106 = sphi 0, %s92
    %s110 = sphi 0, %s110
    %s112 = sphi 0, %s110
    %s113 = sphi 0, %s112
    %s127 = sphi 0, %s113
    %s133 = sphi 0, %s135
    %s136 = sphi 0, %s133
    %s137 = sphi 0, %s136
    %s153 = sphi 0, %s137
  $region4: #{tpu_custom_call.1} parent=0 // loop_header_branch
    %16 = sbr.rel (%p14) target = $region8
  $region5: #{tpu_custom_call.1} parent=0 // loop_body
    %s18 = ssub.s32 %s13, 1
    %s19 = ssub.s32 %s13, 2
    %s20 = sadd.s32 %s13, 1
    %s21 = ssub.s32 %s13, %s20
    %p22 = scmp.eq.s32.totalorder %s21, 0
    %s24 = sadd.s32 %s23, 1
    %s25 = scalar_select %p22, %s23, %s24
    %p28 = pneg %p22
    %p29 = scmp.eq.s32.totalorder %s13, 1
    %p30 = por %p28, %p29
    %p31 = scmp.ne.s32.totalorder %s23, %s26
    %p32 = scmp.eq.s32.totalorder %s13, 0
    %p33 = por %p31, %p32
    %p34 = scmp.ne.s32.totalorder %s23, %s26
    %p35 = scmp.eq.s32.totalorder %s18, 1
    %p36 = por %p34, %p35
    %p37 = scmp.ne.s32.totalorder %s26, %s27
    %p38 = scmp.eq.s32.totalorder %s18, 0
    %p39 = por %p37, %p38
    %p40 = scmp.ne.s32.totalorder %s26, %s27
    %p41 = scmp.eq.s32.totalorder %s19, 1
    %p42 = por %p40, %p41
    %p44 = scmp.ne.s32.totalorder %s27, %s43
    %p45 = scmp.eq.s32.totalorder %s19, 0
    %p46 = por %p44, %p45
    %s48 = sadd.s32 %s47, 1
    %p51 = scmp.eq.s32.totalorder %s13, 1
    %p52 = scmp.ne.s32.totalorder %s47, %s49
    %p53 = scmp.eq.s32.totalorder %s13, 0
    %p54 = por %p52, %p53
    %p55 = scmp.ne.s32.totalorder %s47, %s49
    %p56 = scmp.eq.s32.totalorder %s18, 1
    %p57 = por %p55, %p56
    %p58 = scmp.ne.s32.totalorder %s49, %s50
    %p59 = scmp.eq.s32.totalorder %s18, 0
    %p60 = por %p58, %p59
    %p61 = scmp.ne.s32.totalorder %s49, %s50
    %p62 = scmp.eq.s32.totalorder %s19, 1
    %p63 = por %p61, %p62
    %p65 = scmp.ne.s32.totalorder %s50, %s64
    %p66 = scmp.eq.s32.totalorder %s19, 0
    %p67 = por %p65, %p66
    %s69 = sadd.s32 %s68, 1
    %p72 = scmp.eq.s32.totalorder %s13, 1
    %p73 = scmp.ne.s32.totalorder %s68, %s70
    %p74 = scmp.eq.s32.totalorder %s13, 0
    %p75 = por %p73, %p74
    %p76 = scmp.ne.s32.totalorder %s68, %s70
    %p77 = scmp.eq.s32.totalorder %s18, 1
    %p78 = por %p76, %p77
    %p79 = scmp.ne.s32.totalorder %s70, %s71
    %p80 = scmp.eq.s32.totalorder %s18, 0
    %p81 = por %p79, %p80
    %p82 = scmp.ne.s32.totalorder %s70, %s71
    %p83 = scmp.eq.s32.totalorder %s19, 1
    %p84 = por %p82, %p83
    %p86 = scmp.ne.s32.totalorder %s71, %s85
    %p87 = scmp.eq.s32.totalorder %s19, 0
    %p88 = por %p86, %p87
    %s90 = sadd.s32 %s89, 1
    %p93 = scmp.eq.s32.totalorder %s13, 1
    %p94 = scmp.ne.s32.totalorder %s89, %s91
    %p95 = scmp.eq.s32.totalorder %s13, 0
    %p96 = por %p94, %p95
    %p97 = scmp.ne.s32.totalorder %s89, %s91
    %p98 = scmp.eq.s32.totalorder %s18, 1
    %p99 = por %p97, %p98
    %p100 = scmp.ne.s32.totalorder %s91, %s92
    %p101 = scmp.eq.s32.totalorder %s18, 0
    %p102 = por %p100, %p101
    %p103 = scmp.ne.s32.totalorder %s91, %s92
    %p104 = scmp.eq.s32.totalorder %s19, 1
    %p105 = por %p103, %p104
    %p107 = scmp.ne.s32.totalorder %s92, %s106
    %p108 = scmp.eq.s32.totalorder %s19, 0
    %p109 = por %p107, %p108
    %s111 = sadd.s32 %s110, 1
    %p114 = scmp.eq.s32.totalorder %s13, 1
    %p115 = scmp.ne.s32.totalorder %s110, %s112
    %p116 = scmp.eq.s32.totalorder %s13, 0
    %p117 = por %p115, %p116
    %p118 = scmp.ne.s32.totalorder %s110, %s112
    %p119 = scmp.eq.s32.totalorder %s18, 1
    %p120 = por %p118, %p119
    %p121 = scmp.ne.s32.totalorder %s112, %s113
    %p122 = scmp.eq.s32.totalorder %s18, 0
    %p123 = por %p121, %p122
    %p124 = scmp.ne.s32.totalorder %s112, %s113
    %p125 = scmp.eq.s32.totalorder %s19, 1
    %p126 = por %p124, %p125
    %p128 = scmp.ne.s32.totalorder %s113, %s127
    %p129 = scmp.eq.s32.totalorder %s19, 0
    %p130 = por %p128, %p129
    %s131 = ssub.s32 %s13, %s20
    %p132 = scmp.eq.s32.totalorder %s131, 0
    %s134 = sadd.s32 %s133, 1
    %s135 = scalar_select %p132, %s133, %s134
    %p138 = pneg %p132
    %p139 = scmp.eq.s32.totalorder %s13, 1
    %p140 = por %p138, %p139
    %p141 = scmp.ne.s32.totalorder %s133, %s136
    %p142 = scmp.eq.s32.totalorder %s13, 0
    %p143 = por %p141, %p142
    %p144 = scmp.ne.s32.totalorder %s133, %s136
    %p145 = scmp.eq.s32.totalorder %s18, 1
    %p146 = por %p144, %p145
    %p147 = scmp.ne.s32.totalorder %s136, %s137
    %p148 = scmp.eq.s32.totalorder %s18, 0
    %p149 = por %p147, %p148
    %p150 = scmp.ne.s32.totalorder %s136, %s137
    %p151 = scmp.eq.s32.totalorder %s19, 1
    %p152 = por %p150, %p151
    %p154 = scmp.ne.s32.totalorder %s137, %s153
    %p155 = scmp.eq.s32.totalorder %s19, 0
    %p156 = por %p154, %p155
    %p157 = scmp.le.s32.totalorder 1, %s13
    %p158 = scmp.lt.s32.totalorder %s13, 3
    %p159 = pnand %p157, %p158
    %p160 = pneg %p159
    // Predicated region
    $region9: #{tpu_custom_call.1} parent=5 // pred_check
      _
    $region10: #{tpu_custom_call.1} parent=5 // pred_check_branch
      %162 = sbr.rel (%p159) target = $region12
    $region11: #{tpu_custom_call.1} parent=5 // pred_region
      %s163 = ssub.s32 %s13, 1
      // Predicated region
      $region13: #{tpu_custom_call.1} parent=11 // pred_check
        %p164 = pneg %p60
      $region14: #{tpu_custom_call.1} parent=11 // pred_check_branch
        %166 = sbr.rel (%p164) target = $region16
      $region15: #{tpu_custom_call.1} parent=11 // pred_region
        _
      $region16: #{tpu_custom_call.1} parent=11 // pred_fallthru
        _
      // Predicated region
      $region17: #{tpu_custom_call.1} parent=11 // pred_check
        %p167 = pneg %p81
      $region18: #{tpu_custom_call.1} parent=11 // pred_check_branch
        %169 = sbr.rel (%p167) target = $region20
      $region19: #{tpu_custom_call.1} parent=11 // pred_region
        _
      $region20: #{tpu_custom_call.1} parent=11 // pred_fallthru
        _
      // Predicated region
      $region21: #{tpu_custom_call.1} parent=11 // pred_check
        %p170 = pneg %p102
      $region22: #{tpu_custom_call.1} parent=11 // pred_check_branch
        %172 = sbr.rel (%p170) target = $region24
      $region23: #{tpu_custom_call.1} parent=11 // pred_region
        _
      $region24: #{tpu_custom_call.1} parent=11 // pred_fallthru
        _
      // Predicated region
      $region25: #{tpu_custom_call.1} parent=11 // pred_check
        %p173 = pneg %p123
      $region26: #{tpu_custom_call.1} parent=11 // pred_check_branch
        %175 = sbr.rel (%p173) target = $region28
      $region27: #{tpu_custom_call.1} parent=11 // pred_region
        _
      $region28: #{tpu_custom_call.1} parent=11 // pred_fallthru
        _
    $region12: #{tpu_custom_call.1} parent=5 // pred_fallthru
      _
    %p176 = scmp.lt.s32.totalorder %s13, 2
    // Predicated region
    $region29: #{tpu_custom_call.1} parent=5 // pred_check
      %p177 = pneg %p176
    $region30: #{tpu_custom_call.1} parent=5 // pred_check_branch
      %179 = sbr.rel (%p177) target = $region32
    $region31: #{tpu_custom_call.1} parent=5 // pred_region
      // Predicated region
      $region33: #{tpu_custom_call.1} parent=31 // pred_check
        %p180 = pneg %p33
      $region34: #{tpu_custom_call.1} parent=31 // pred_check_branch
        %182 = sbr.rel (%p180) target = $region36
      $region35: #{tpu_custom_call.1} parent=31 // pred_region
        %s183 = smul.u32 32, %s13
        %p184 = scmp.lt.s32.totalorder %s183, 63
        %s185 = scalar_select %p184, %s183, 63
        %s186 = smul.addr %s185, 8
        %s187 = scalar_lea.vmem %s0, %s186
        %s188 = smul.u32 32, %s13
      $region36: #{tpu_custom_call.1} parent=31 // pred_fallthru
        _
    $region32: #{tpu_custom_call.1} parent=5 // pred_fallthru
      _
    %p189 = scmp.le.s32.totalorder 1, %s13
    %p190 = scmp.lt.s32.totalorder %s13, 3
    %p191 = pnand %p189, %p190
    %p192 = pneg %p191
    // Predicated region
    $region37: #{tpu_custom_call.1} parent=5 // pred_check
      _
    $region38: #{tpu_custom_call.1} parent=5 // pred_check_branch
      %194 = sbr.rel (%p191) target = $region40
    $region39: #{tpu_custom_call.1} parent=5 // pred_region
      %s195 = ssub.s32 %s13, 1
      %s196 = smul.u32 32, %s18
      %p197 = scmp.lt.s32.totalorder %s196, 63
      %s198 = scalar_select %p197, %s196, 63
      %s199 = smul.addr %s198, 8
      %s200 = scalar_lea.vmem %s0, %s199
      %p201 = pneg %p39
      %p202 = pneg %p36
      %p203 = pneg %p60
      %p204 = pneg %p57
      %p205 = pneg %p81
      %p206 = pneg %p78
      %p207 = pneg %p102
      %p208 = pneg %p99
      %p209 = pneg %p123
      %p210 = pneg %p120
      %p211 = pneg %p149
      %p212 = pneg %p146
      %s213 = smul.u32 32, %s18
      %p214 = scmp.lt.s32.totalorder %s213, 63
      %s215 = scalar_select %p214, %s213, 63
      %s216 = smul.addr %s215, 8
      %s217 = scalar_lea.vmem %s5, %s216
      %s218 = smul.u32 32, %s18
      %p219 = scmp.lt.s32.totalorder %s218, 63
      %s220 = scalar_select %p219, %s218, 63
      %s221 = smul.addr %s220, 8
      %s222 = scalar_lea.vmem %s0, %s221
      %s223 = smul.u32 32, %s18
      %s224 = smul.u32 32, %s18
      %p225 = scmp.lt.s32.totalorder %s224, 63
      %s226 = scalar_select %p225, %s224, 63
      %s227 = smul.addr %s226, 8
      %s228 = scalar_lea.vmem %s5, %s227
      %s229 = smul.u32 32, %s18
      %v230 = vld [vmem:[%s222] sm:$0xff]
      %v231 = vld [vmem:[%s222 + $0x8] sm:$0xff]
      %v232 = vld [vmem:[%s222 + $0x10] sm:$0xff]
      %v233 = vld [vmem:[%s222 + $0x18] sm:$0xff]
      %v234 = vld [vmem:[%s222 + $0x20] sm:$0xff]
      %v235 = vld [vmem:[%s222 + $0x28] sm:$0xff]
      %v236 = vld [vmem:[%s222 + $0x30] sm:$0xff]
      %v237 = vld [vmem:[%s222 + $0x38] sm:$0xff]
      %v238 = vld [vmem:[%s222 + $0x40] sm:$0xff]
      %v239 = vld [vmem:[%s222 + $0x48] sm:$0xff]
      %v240 = vld [vmem:[%s222 + $0x50] sm:$0xff]
      %v241 = vld [vmem:[%s222 + $0x58] sm:$0xff]
      %v242 = vld [vmem:[%s222 + $0x60] sm:$0xff]
      %v243 = vld [vmem:[%s222 + $0x68] sm:$0xff]
      %v244 = vld [vmem:[%s222 + $0x70] sm:$0xff]
      %v245 = vld [vmem:[%s222 + $0x78] sm:$0xff]
      %v246 = vld [vmem:[%s222 + $0x80] sm:$0xff]
      %v247 = vld [vmem:[%s222 + $0x88] sm:$0xff]
      %v248 = vld [vmem:[%s222 + $0x90] sm:$0xff]
      %v249 = vld [vmem:[%s222 + $0x98] sm:$0xff]
      %v250 = vld [vmem:[%s222 + $0xa0] sm:$0xff]
      %v251 = vld [vmem:[%s222 + $0xa8] sm:$0xff]
      %v252 = vld [vmem:[%s222 + $0xb0] sm:$0xff]
      %v253 = vld [vmem:[%s222 + $0xb8] sm:$0xff]
      %v254 = vld [vmem:[%s222 + $0xc0] sm:$0xff]
      %v255 = vld [vmem:[%s222 + $0xc8] sm:$0xff]
      %v256 = vld [vmem:[%s222 + $0xd0] sm:$0xff]
      %v257 = vld [vmem:[%s222 + $0xd8] sm:$0xff]
      %v258 = vld [vmem:[%s222 + $0xe0] sm:$0xff]
      %v259 = vld [vmem:[%s222 + $0xe8] sm:$0xff]
      %v260 = vld [vmem:[%s222 + $0xf0] sm:$0xff]
      %v261 = vld [vmem:[%s222 + $0xf8] sm:$0xff]
      %v262 = vld [vmem:[%s1] sm:$0xff]
      %v263 = vld [vmem:[%s1 + $0x8] sm:$0xff]
      %v264 = vld [vmem:[%s2] sm:$0x1]
      %v265 = vld [vmem:[%s3] sm:$0xff]
      %v266 = vld [vmem:[%s3 + $0x8] sm:$0xff]
      %v267 = vld [vmem:[%s3 + $0x10] sm:$0xff]
      %v268 = vld [vmem:[%s3 + $0x18] sm:$0xff]
      %v269 = vld [vmem:[#allocation2] sm:$0x1]
      %v271 = vlaneseq
      %v272 = vshrl.u32 %v271, 7
      %v273 = vsub.s32 0, %v272
      %v274 = vrot.slane %v264, %v273
      %vm276 = vcmask 130048
      %v278 = vsel %vm276, %v230, 0
      %v281 = vsel %vm276, %v231, 0
      %v284 = vsel %vm276, %v232, 0
      %v287 = vsel %vm276, %v233, 0
      %v290 = vsel %vm276, %v234, 0
      %v293 = vsel %vm276, %v235, 0
      %v296 = vsel %vm276, %v236, 0
      %v299 = vsel %vm276, %v237, 0
      %v302 = vsel %vm276, %v238, 0
      %v305 = vsel %vm276, %v239, 0
      %v308 = vsel %vm276, %v240, 0
      %v311 = vsel %vm276, %v241, 0
      %v314 = vsel %vm276, %v242, 0
      %v317 = vsel %vm276, %v243, 0
      %v320 = vsel %vm276, %v244, 0
      %v323 = vsel %vm276, %v245, 0
      %v326 = vsel %vm276, %v246, 0
      %v329 = vsel %vm276, %v247, 0
      %v332 = vsel %vm276, %v248, 0
      %v335 = vsel %vm276, %v249, 0
      %v338 = vsel %vm276, %v250, 0
      %v341 = vsel %vm276, %v251, 0
      %v344 = vsel %vm276, %v252, 0
      %v347 = vsel %vm276, %v253, 0
      %v350 = vsel %vm276, %v254, 0
      %v353 = vsel %vm276, %v255, 0
      %v356 = vsel %vm276, %v256, 0
      %v359 = vsel %vm276, %v257, 0
      %v362 = vsel %vm276, %v258, 0
      %v365 = vsel %vm276, %v259, 0
      %v368 = vsel %vm276, %v260, 0
      %v371 = vsel %vm276, %v261, 0
      %373 = vmatprep.subr.mxu0 0.0
      %374 = vmatpush1.msra.mxu0 0.0
      %375 = vmatprep.subr.mxu0 0.0
      %376 = vmatpush1.msra.mxu0 0.0
      %377 = vmatprep.subr.mxu0 0.0
      %378 = vmatpush1.msra.mxu0 0.0
      %379 = vmatprep.subr.mxu0 0.0
      %380 = vmatpush1.msra.mxu0 0.0
      %381 = vmatprep.subr.mxu0 0.0
      %382 = vmatpush1.msra.mxu0 0.0
      %383 = vmatprep.subr.mxu0 0.0
      %384 = vmatpush1.msra.mxu0 0.0
      %385 = vmatprep.subr.mxu0 0.0
      %386 = vmatpush1.msra.mxu0 0.0
      %387 = vmatprep.subr.mxu0 0.0
      %388 = vmatpush1.msra.mxu0 0.0
      %389 = vmatprep.subr.mxu0 0.0
      %390 = vmatpush1.msra.mxu0 0.0
      %391 = vmatprep.subr.mxu0 0.0
      %392 = vmatpush1.msra.mxu0 0.0
      %393 = vmatprep.subr.mxu0 0.0
      %394 = vmatpush1.msra.mxu0 0.0
      %395 = vmatprep.subr.mxu0 0.0
      %396 = vmatpush1.msra.mxu0 0.0
      %397 = vmatprep.subr.mxu0 0.0
      %398 = vmatpush1.msra.mxu0 0.0
      %399 = vmatprep.subr.mxu0 0.0
      %400 = vmatpush1.msra.mxu0 0.0
      %401 = vmatprep.subr.mxu0 0.0
      %402 = vmatpush1.msra.mxu0 %v263
      %403 = vmatprep.subr.mxu0 0.0
      %404 = vmatpush1.msra.mxu0 %v262
      %405 = vmatprep.subr.mxu0 0.0
      %406 = vmatpush2.msra.mxu0 0.0
      %407 = vmatprep.subr.mxu0 0.0
      %408 = vmatpush2.msra.mxu0 0.0
      %409 = vmatprep.subr.mxu0 0.0
      %410 = vmatpush2.msra.mxu0 0.0
      %411 = vmatprep.subr.mxu0 0.0
      %412 = vmatpush2.msra.mxu0 0.0
      %413 = vmatprep.subr.mxu0 0.0
      %414 = vmatpush2.msra.mxu0 0.0
      %415 = vmatprep.subr.mxu0 0.0
      %416 = vmatpush2.msra.mxu0 0.0
      %417 = vmatprep.subr.mxu0 0.0
      %418 = vmatpush2.msra.mxu0 0.0
      %419 = vmatprep.subr.mxu0 0.0
      %420 = vmatpush2.msra.mxu0 0.0
      %421 = vmatprep.subr.mxu0 0.0
      %422 = vmatpush2.msra.mxu0 0.0
      %423 = vmatprep.subr.mxu0 0.0
      %424 = vmatpush2.msra.mxu0 0.0
      %425 = vmatprep.subr.mxu0 0.0
      %426 = vmatpush2.msra.mxu0 0.0
      %427 = vmatprep.subr.mxu0 0.0
      %428 = vmatpush2.msra.mxu0 0.0
      %429 = vmatprep.subr.mxu0 0.0
      %430 = vmatpush2.msra.mxu0 0.0
      %431 = vmatprep.subr.mxu0 0.0
      %432 = vmatpush2.msra.mxu0 0.0
      %433 = vmatprep.subr.mxu0 0.0
      %434 = vmatpush2.msra.mxu0 0.0
      %435 = vmatprep.subr.mxu0 0.0
      %436 = vmatpush2.msra.mxu0 0.0
      %437 = vmatprep.mubr.f32.mxu0 0.0
      %438 = vmatmul.mubr.f32.gmra.mxu0 %v278
      %v439 = vpop.f32.mrf.mxu0
      %v440 = vadd.f32 %v274, %v439
      %v441 = vpop.f32.mrf.mxu0
      %442 = vmatprep.mubr.f32.mxu0 0.0
      %443 = vmatmul.mubr.f32.gmra.mxu0 %v281
      %v444 = vpop.f32.mrf.mxu0
      %v445 = vadd.f32 %v274, %v444
      %v446 = vpop.f32.mrf.mxu0
      %447 = vmatprep.mubr.f32.mxu0 0.0
      %448 = vmatmul.mubr.f32.gmra.mxu0 %v284
      %v449 = vpop.f32.mrf.mxu0
      %v450 = vadd.f32 %v274, %v449
      %v451 = vpop.f32.mrf.mxu0
      %452 = vmatprep.mubr.f32.mxu0 0.0
      %453 = vmatmul.mubr.f32.gmra.mxu0 %v287
      %v454 = vpop.f32.mrf.mxu0
      %v455 = vadd.f32 %v274, %v454
      %v456 = vpop.f32.mrf.mxu0
      %457 = vmatprep.mubr.f32.mxu0 0.0
      %458 = vmatmul.mubr.f32.gmra.mxu0 %v290
      %v459 = vpop.f32.mrf.mxu0
      %v460 = vadd.f32 %v274, %v459
      %v461 = vpop.f32.mrf.mxu0
      %462 = vmatprep.mubr.f32.mxu0 0.0
      %463 = vmatmul.mubr.f32.gmra.mxu0 %v293
      %v464 = vpop.f32.mrf.mxu0
      %v465 = vadd.f32 %v274, %v464
      %v466 = vpop.f32.mrf.mxu0
      %467 = vmatprep.mubr.f32.mxu0 0.0
      %468 = vmatmul.mubr.f32.gmra.mxu0 %v296
      %v469 = vpop.f32.mrf.mxu0
      %v470 = vadd.f32 %v274, %v469
      %v471 = vpop.f32.mrf.mxu0
      %472 = vmatprep.mubr.f32.mxu0 0.0
      %473 = vmatmul.mubr.f32.gmra.mxu0 %v299
      %v474 = vpop.f32.mrf.mxu0
      %v475 = vadd.f32 %v274, %v474
      %v476 = vpop.f32.mrf.mxu0
      %477 = vmatprep.mubr.f32.mxu0 0.0
      %478 = vmatmul.mubr.f32.gmra.mxu0 %v302
      %v479 = vpop.f32.mrf.mxu0
      %v480 = vadd.f32 %v274, %v479
      %v481 = vpop.f32.mrf.mxu0
      %482 = vmatprep.mubr.f32.mxu0 0.0
      %483 = vmatmul.mubr.f32.gmra.mxu0 %v305
      %v484 = vpop.f32.mrf.mxu0
      %v485 = vadd.f32 %v274, %v484
      %v486 = vpop.f32.mrf.mxu0
      %487 = vmatprep.mubr.f32.mxu0 0.0
      %488 = vmatmul.mubr.f32.gmra.mxu0 %v308
      %v489 = vpop.f32.mrf.mxu0
      %v490 = vadd.f32 %v274, %v489
      %v491 = vpop.f32.mrf.mxu0
      %492 = vmatprep.mubr.f32.mxu0 0.0
      %493 = vmatmul.mubr.f32.gmra.mxu0 %v311
      %v494 = vpop.f32.mrf.mxu0
      %v495 = vadd.f32 %v274, %v494
      %v496 = vpop.f32.mrf.mxu0
      %497 = vmatprep.mubr.f32.mxu0 0.0
      %498 = vmatmul.mubr.f32.gmra.mxu0 %v314
      %v499 = vpop.f32.mrf.mxu0
      %v500 = vadd.f32 %v274, %v499
      %v501 = vpop.f32.mrf.mxu0
      %502 = vmatprep.mubr.f32.mxu0 0.0
      %503 = vmatmul.mubr.f32.gmra.mxu0 %v317
      %v504 = vpop.f32.mrf.mxu0
      %v505 = vadd.f32 %v274, %v504
      %v506 = vpop.f32.mrf.mxu0
      %507 = vmatprep.mubr.f32.mxu0 0.0
      %508 = vmatmul.mubr.f32.gmra.mxu0 %v320
      %v509 = vpop.f32.mrf.mxu0
      %v510 = vadd.f32 %v274, %v509
      %v511 = vpop.f32.mrf.mxu0
      %512 = vmatprep.mubr.f32.mxu0 0.0
      %513 = vmatmul.mubr.f32.gmra.mxu0 %v323
      %v514 = vpop.f32.mrf.mxu0
      %v515 = vadd.f32 %v274, %v514
      %v516 = vpop.f32.mrf.mxu0
      %517 = vmatprep.mubr.f32.mxu0 0.0
      %518 = vmatmul.mubr.f32.gmra.mxu0 %v326
      %v519 = vpop.f32.mrf.mxu0
      %v520 = vadd.f32 %v274, %v519
      %v521 = vpop.f32.mrf.mxu0
      %522 = vmatprep.mubr.f32.mxu0 0.0
      %523 = vmatmul.mubr.f32.gmra.mxu0 %v329
      %v524 = vpop.f32.mrf.mxu0
      %v525 = vadd.f32 %v274, %v524
      %v526 = vpop.f32.mrf.mxu0
      %527 = vmatprep.mubr.f32.mxu0 0.0
      %528 = vmatmul.mubr.f32.gmra.mxu0 %v332
      %v529 = vpop.f32.mrf.mxu0
      %v530 = vadd.f32 %v274, %v529
      %v531 = vpop.f32.mrf.mxu0
      %532 = vmatprep.mubr.f32.mxu0 0.0
      %533 = vmatmul.mubr.f32.gmra.mxu0 %v335
      %v534 = vpop.f32.mrf.mxu0
      %v535 = vadd.f32 %v274, %v534
      %v536 = vpop.f32.mrf.mxu0
      %537 = vmatprep.mubr.f32.mxu0 0.0
      %538 = vmatmul.mubr.f32.gmra.mxu0 %v338
      %v539 = vpop.f32.mrf.mxu0
      %v540 = vadd.f32 %v274, %v539
      %v541 = vpop.f32.mrf.mxu0
      %542 = vmatprep.mubr.f32.mxu0 0.0
      %543 = vmatmul.mubr.f32.gmra.mxu0 %v341
      %v544 = vpop.f32.mrf.mxu0
      %v545 = vadd.f32 %v274, %v544
      %v546 = vpop.f32.mrf.mxu0
      %547 = vmatprep.mubr.f32.mxu0 0.0
      %548 = vmatmul.mubr.f32.gmra.mxu0 %v344
      %v549 = vpop.f32.mrf.mxu0
      %v550 = vadd.f32 %v274, %v549
      %v551 = vpop.f32.mrf.mxu0
      %552 = vmatprep.mubr.f32.mxu0 0.0
      %553 = vmatmul.mubr.f32.gmra.mxu0 %v347
      %v554 = vpop.f32.mrf.mxu0
      %v555 = vadd.f32 %v274, %v554
      %v556 = vpop.f32.mrf.mxu0
      %557 = vmatprep.mubr.f32.mxu0 0.0
      %558 = vmatmul.mubr.f32.gmra.mxu0 %v350
      %v559 = vpop.f32.mrf.mxu0
      %v560 = vadd.f32 %v274, %v559
      %v561 = vpop.f32.mrf.mxu0
      %562 = vmatprep.mubr.f32.mxu0 0.0
      %563 = vmatmul.mubr.f32.gmra.mxu0 %v353
      %v564 = vpop.f32.mrf.mxu0
      %v565 = vadd.f32 %v274, %v564
      %v566 = vpop.f32.mrf.mxu0
      %567 = vmatprep.mubr.f32.mxu0 0.0
      %568 = vmatmul.mubr.f32.gmra.mxu0 %v356
      %v569 = vpop.f32.mrf.mxu0
      %v570 = vadd.f32 %v274, %v569
      %v571 = vpop.f32.mrf.mxu0
      %572 = vmatprep.mubr.f32.mxu0 0.0
      %573 = vmatmul.mubr.f32.gmra.mxu0 %v359
      %v574 = vpop.f32.mrf.mxu0
      %v575 = vadd.f32 %v274, %v574
      %v576 = vpop.f32.mrf.mxu0
      %577 = vmatprep.mubr.f32.mxu0 0.0
      %578 = vmatmul.mubr.f32.gmra.mxu0 %v362
      %v579 = vpop.f32.mrf.mxu0
      %v580 = vadd.f32 %v274, %v579
      %v581 = vpop.f32.mrf.mxu0
      %582 = vmatprep.mubr.f32.mxu0 0.0
      %583 = vmatmul.mubr.f32.gmra.mxu0 %v365
      %v584 = vpop.f32.mrf.mxu0
      %v585 = vadd.f32 %v274, %v584
      %v586 = vpop.f32.mrf.mxu0
      %587 = vmatprep.mubr.f32.mxu0 0.0
      %588 = vmatmul.mubr.f32.gmra.mxu0 %v368
      %v589 = vpop.f32.mrf.mxu0
      %v590 = vadd.f32 %v274, %v589
      %v591 = vpop.f32.mrf.mxu0
      %592 = vmatprep.mubr.f32.mxu0 0.0
      %593 = vmatmul.mubr.f32.gmra.mxu0 %v371
      %v594 = vpop.f32.mrf.mxu0
      %v595 = vadd.f32 %v274, %v594
      %v596 = vpop.f32.mrf.mxu0
      %597 = vdwg.mxu0
      %v598 = vmax.f32 %v440, 0.0
      %v599 = vmax.f32 %v445, 0.0
      %v600 = vmax.f32 %v450, 0.0
      %v601 = vmax.f32 %v455, 0.0
      %v602 = vmax.f32 %v460, 0.0
      %v603 = vmax.f32 %v465, 0.0
      %v604 = vmax.f32 %v470, 0.0
      %v605 = vmax.f32 %v475, 0.0
      %v606 = vmax.f32 %v480, 0.0
      %v607 = vmax.f32 %v485, 0.0
      %v608 = vmax.f32 %v490, 0.0
      %v609 = vmax.f32 %v495, 0.0
      %v610 = vmax.f32 %v500, 0.0
      %v611 = vmax.f32 %v505, 0.0
      %v612 = vmax.f32 %v510, 0.0
      %v613 = vmax.f32 %v515, 0.0
      %v614 = vmax.f32 %v520, 0.0
      %v615 = vmax.f32 %v525, 0.0
      %v616 = vmax.f32 %v530, 0.0
      %v617 = vmax.f32 %v535, 0.0
      %v618 = vmax.f32 %v540, 0.0
      %v619 = vmax.f32 %v545, 0.0
      %v620 = vmax.f32 %v550, 0.0
      %v621 = vmax.f32 %v555, 0.0
      %v622 = vmax.f32 %v560, 0.0
      %v623 = vmax.f32 %v565, 0.0
      %v624 = vmax.f32 %v570, 0.0
      %v625 = vmax.f32 %v575, 0.0
      %v626 = vmax.f32 %v580, 0.0
      %v627 = vmax.f32 %v585, 0.0
      %v628 = vmax.f32 %v590, 0.0
      %v629 = vmax.f32 %v595, 0.0
      %v631 = vlaneseq
      %v632 = vshrl.u32 %v631, 7
      %v633 = vsub.s32 0, %v632
      %v634 = vrot.slane %v269, %v633
      %vm636 = vcmask 261120
      %v638 = vsel %vm636, %v598, 0
      %v641 = vsel %vm636, %v599, 0
      %v644 = vsel %vm636, %v600, 0
      %v647 = vsel %vm636, %v601, 0
      %v650 = vsel %vm636, %v602, 0
      %v653 = vsel %vm636, %v603, 0
      %v656 = vsel %vm636, %v604, 0
      %v659 = vsel %vm636, %v605, 0
      %v662 = vsel %vm636, %v606, 0
      %v665 = vsel %vm636, %v607, 0
      %v668 = vsel %vm636, %v608, 0
      %v671 = vsel %vm636, %v609, 0
      %v674 = vsel %vm636, %v610, 0
      %v677 = vsel %vm636, %v611, 0
      %v680 = vsel %vm636, %v612, 0
      %v683 = vsel %vm636, %v613, 0
      %v686 = vsel %vm636, %v614, 0
      %v689 = vsel %vm636, %v615, 0
      %v692 = vsel %vm636, %v616, 0
      %v695 = vsel %vm636, %v617, 0
      %v698 = vsel %vm636, %v618, 0
      %v701 = vsel %vm636, %v619, 0
      %v704 = vsel %vm636, %v620, 0
      %v707 = vsel %vm636, %v621, 0
      %v710 = vsel %vm636, %v622, 0
      %v713 = vsel %vm636, %v623, 0
      %v716 = vsel %vm636, %v624, 0
      %v719 = vsel %vm636, %v625, 0
      %v722 = vsel %vm636, %v626, 0
      %v725 = vsel %vm636, %v627, 0
      %v728 = vsel %vm636, %v628, 0
      %v731 = vsel %vm636, %v629, 0
      %733 = vmatprep.subr.mxu0 0.0
      %734 = vmatpush1.msra.mxu0 0.0
      %735 = vmatprep.subr.mxu0 0.0
      %736 = vmatpush1.msra.mxu0 0.0
      %737 = vmatprep.subr.mxu0 0.0
      %738 = vmatpush1.msra.mxu0 0.0
      %739 = vmatprep.subr.mxu0 0.0
      %740 = vmatpush1.msra.mxu0 0.0
      %741 = vmatprep.subr.mxu0 0.0
      %742 = vmatpush1.msra.mxu0 0.0
      %743 = vmatprep.subr.mxu0 0.0
      %744 = vmatpush1.msra.mxu0 0.0
      %745 = vmatprep.subr.mxu0 0.0
      %746 = vmatpush1.msra.mxu0 0.0
      %747 = vmatprep.subr.mxu0 0.0
      %748 = vmatpush1.msra.mxu0 0.0
      %749 = vmatprep.subr.mxu0 0.0
      %750 = vmatpush1.msra.mxu0 0.0
      %751 = vmatprep.subr.mxu0 0.0
      %752 = vmatpush1.msra.mxu0 0.0
      %753 = vmatprep.subr.mxu0 0.0
      %754 = vmatpush1.msra.mxu0 0.0
      %755 = vmatprep.subr.mxu0 0.0
      %756 = vmatpush1.msra.mxu0 0.0
      %757 = vmatprep.subr.mxu0 0.0
      %758 = vmatpush1.msra.mxu0 %v268
      %759 = vmatprep.subr.mxu0 0.0
      %760 = vmatpush1.msra.mxu0 %v267
      %761 = vmatprep.subr.mxu0 0.0
      %762 = vmatpush1.msra.mxu0 %v266
      %763 = vmatprep.subr.mxu0 0.0
      %764 = vmatpush1.msra.mxu0 %v265
      %765 = vmatprep.subr.mxu0 0.0
      %766 = vmatpush2.msra.mxu0 0.0
      %767 = vmatprep.subr.mxu0 0.0
      %768 = vmatpush2.msra.mxu0 0.0
      %769 = vmatprep.subr.mxu0 0.0
      %770 = vmatpush2.msra.mxu0 0.0
      %771 = vmatprep.subr.mxu0 0.0
      %772 = vmatpush2.msra.mxu0 0.0
      %773 = vmatprep.subr.mxu0 0.0
      %774 = vmatpush2.msra.mxu0 0.0
      %775 = vmatprep.subr.mxu0 0.0
      %776 = vmatpush2.msra.mxu0 0.0
      %777 = vmatprep.subr.mxu0 0.0
      %778 = vmatpush2.msra.mxu0 0.0
      %779 = vmatprep.subr.mxu0 0.0
      %780 = vmatpush2.msra.mxu0 0.0
      %781 = vmatprep.subr.mxu0 0.0
      %782 = vmatpush2.msra.mxu0 0.0
      %783 = vmatprep.subr.mxu0 0.0
      %784 = vmatpush2.msra.mxu0 0.0
      %785 = vmatprep.subr.mxu0 0.0
      %786 = vmatpush2.msra.mxu0 0.0
      %787 = vmatprep.subr.mxu0 0.0
      %788 = vmatpush2.msra.mxu0 0.0
      %789 = vmatprep.subr.mxu0 0.0
      %790 = vmatpush2.msra.mxu0 0.0
      %791 = vmatprep.subr.mxu0 0.0
      %792 = vmatpush2.msra.mxu0 0.0
      %793 = vmatprep.subr.mxu0 0.0
      %794 = vmatpush2.msra.mxu0 0.0
      %795 = vmatprep.subr.mxu0 0.0
      %796 = vmatpush2.msra.mxu0 0.0
      %797 = vmatprep.mubr.f32.mxu0 0.0
      %798 = vmatmul.mubr.f32.gmra.mxu0 %v638
      %v799 = vpop.f32.mrf.mxu0
      %v800 = vadd.f32 %v634, %v799
      %v801 = vpop.f32.mrf.mxu0
      %802 = vmatprep.mubr.f32.mxu0 0.0
      %803 = vmatmul.mubr.f32.gmra.mxu0 %v641
      %v804 = vpop.f32.mrf.mxu0
      %v805 = vadd.f32 %v634, %v804
      %v806 = vpop.f32.mrf.mxu0
      %807 = vmatprep.mubr.f32.mxu0 0.0
      %808 = vmatmul.mubr.f32.gmra.mxu0 %v644
      %v809 = vpop.f32.mrf.mxu0
      %v810 = vadd.f32 %v634, %v809
      %v811 = vpop.f32.mrf.mxu0
      %812 = vmatprep.mubr.f32.mxu0 0.0
      %813 = vmatmul.mubr.f32.gmra.mxu0 %v647
      %v814 = vpop.f32.mrf.mxu0
      %v815 = vadd.f32 %v634, %v814
      %v816 = vpop.f32.mrf.mxu0
      %817 = vmatprep.mubr.f32.mxu0 0.0
      %818 = vmatmul.mubr.f32.gmra.mxu0 %v650
      %v819 = vpop.f32.mrf.mxu0
      %v820 = vadd.f32 %v634, %v819
      %v821 = vpop.f32.mrf.mxu0
      %822 = vmatprep.mubr.f32.mxu0 0.0
      %823 = vmatmul.mubr.f32.gmra.mxu0 %v653
      %v824 = vpop.f32.mrf.mxu0
      %v825 = vadd.f32 %v634, %v824
      %v826 = vpop.f32.mrf.mxu0
      %827 = vmatprep.mubr.f32.mxu0 0.0
      %828 = vmatmul.mubr.f32.gmra.mxu0 %v656
      %v829 = vpop.f32.mrf.mxu0
      %v830 = vadd.f32 %v634, %v829
      %v831 = vpop.f32.mrf.mxu0
      %832 = vmatprep.mubr.f32.mxu0 0.0
      %833 = vmatmul.mubr.f32.gmra.mxu0 %v659
      %v834 = vpop.f32.mrf.mxu0
      %v835 = vadd.f32 %v634, %v834
      %v836 = vpop.f32.mrf.mxu0
      %837 = vmatprep.mubr.f32.mxu0 0.0
      %838 = vmatmul.mubr.f32.gmra.mxu0 %v662
      %v839 = vpop.f32.mrf.mxu0
      %v840 = vadd.f32 %v634, %v839
      %v841 = vpop.f32.mrf.mxu0
      %842 = vmatprep.mubr.f32.mxu0 0.0
      %843 = vmatmul.mubr.f32.gmra.mxu0 %v665
      %v844 = vpop.f32.mrf.mxu0
      %v845 = vadd.f32 %v634, %v844
      %v846 = vpop.f32.mrf.mxu0
      %847 = vmatprep.mubr.f32.mxu0 0.0
      %848 = vmatmul.mubr.f32.gmra.mxu0 %v668
      %v849 = vpop.f32.mrf.mxu0
      %v850 = vadd.f32 %v634, %v849
      %v851 = vpop.f32.mrf.mxu0
      %852 = vmatprep.mubr.f32.mxu0 0.0
      %853 = vmatmul.mubr.f32.gmra.mxu0 %v671
      %v854 = vpop.f32.mrf.mxu0
      %v855 = vadd.f32 %v634, %v854
      %v856 = vpop.f32.mrf.mxu0
      %857 = vmatprep.mubr.f32.mxu0 0.0
      %858 = vmatmul.mubr.f32.gmra.mxu0 %v674
      %v859 = vpop.f32.mrf.mxu0
      %v860 = vadd.f32 %v634, %v859
      %v861 = vpop.f32.mrf.mxu0
      %862 = vmatprep.mubr.f32.mxu0 0.0
      %863 = vmatmul.mubr.f32.gmra.mxu0 %v677
      %v864 = vpop.f32.mrf.mxu0
      %v865 = vadd.f32 %v634, %v864
      %v866 = vpop.f32.mrf.mxu0
      %867 = vmatprep.mubr.f32.mxu0 0.0
      %868 = vmatmul.mubr.f32.gmra.mxu0 %v680
      %v869 = vpop.f32.mrf.mxu0
      %v870 = vadd.f32 %v634, %v869
      %v871 = vpop.f32.mrf.mxu0
      %872 = vmatprep.mubr.f32.mxu0 0.0
      %873 = vmatmul.mubr.f32.gmra.mxu0 %v683
      %v874 = vpop.f32.mrf.mxu0
      %v875 = vadd.f32 %v634, %v874
      %v876 = vpop.f32.mrf.mxu0
      %877 = vmatprep.mubr.f32.mxu0 0.0
      %878 = vmatmul.mubr.f32.gmra.mxu0 %v686
      %v879 = vpop.f32.mrf.mxu0
      %v880 = vadd.f32 %v634, %v879
      %v881 = vpop.f32.mrf.mxu0
      %882 = vmatprep.mubr.f32.mxu0 0.0
      %883 = vmatmul.mubr.f32.gmra.mxu0 %v689
      %v884 = vpop.f32.mrf.mxu0
      %v885 = vadd.f32 %v634, %v884
      %v886 = vpop.f32.mrf.mxu0
      %887 = vmatprep.mubr.f32.mxu0 0.0
      %888 = vmatmul.mubr.f32.gmra.mxu0 %v692
      %v889 = vpop.f32.mrf.mxu0
      %v890 = vadd.f32 %v634, %v889
      %v891 = vpop.f32.mrf.mxu0
      %892 = vmatprep.mubr.f32.mxu0 0.0
      %893 = vmatmul.mubr.f32.gmra.mxu0 %v695
      %v894 = vpop.f32.mrf.mxu0
      %v895 = vadd.f32 %v634, %v894
      %v896 = vpop.f32.mrf.mxu0
      %897 = vmatprep.mubr.f32.mxu0 0.0
      %898 = vmatmul.mubr.f32.gmra.mxu0 %v698
      %v899 = vpop.f32.mrf.mxu0
      %v900 = vadd.f32 %v634, %v899
      %v901 = vpop.f32.mrf.mxu0
      %902 = vmatprep.mubr.f32.mxu0 0.0
      %903 = vmatmul.mubr.f32.gmra.mxu0 %v701
      %v904 = vpop.f32.mrf.mxu0
      %v905 = vadd.f32 %v634, %v904
      %v906 = vpop.f32.mrf.mxu0
      %907 = vmatprep.mubr.f32.mxu0 0.0
      %908 = vmatmul.mubr.f32.gmra.mxu0 %v704
      %v909 = vpop.f32.mrf.mxu0
      %v910 = vadd.f32 %v634, %v909
      %v911 = vpop.f32.mrf.mxu0
      %912 = vmatprep.mubr.f32.mxu0 0.0
      %913 = vmatmul.mubr.f32.gmra.mxu0 %v707
      %v914 = vpop.f32.mrf.mxu0
      %v915 = vadd.f32 %v634, %v914
      %v916 = vpop.f32.mrf.mxu0
      %917 = vmatprep.mubr.f32.mxu0 0.0
      %918 = vmatmul.mubr.f32.gmra.mxu0 %v710
      %v919 = vpop.f32.mrf.mxu0
      %v920 = vadd.f32 %v634, %v919
      %v921 = vpop.f32.mrf.mxu0
      %922 = vmatprep.mubr.f32.mxu0 0.0
      %923 = vmatmul.mubr.f32.gmra.mxu0 %v713
      %v924 = vpop.f32.mrf.mxu0
      %v925 = vadd.f32 %v634, %v924
      %v926 = vpop.f32.mrf.mxu0
      %927 = vmatprep.mubr.f32.mxu0 0.0
      %928 = vmatmul.mubr.f32.gmra.mxu0 %v716
      %v929 = vpop.f32.mrf.mxu0
      %v930 = vadd.f32 %v634, %v929
      %v931 = vpop.f32.mrf.mxu0
      %932 = vmatprep.mubr.f32.mxu0 0.0
      %933 = vmatmul.mubr.f32.gmra.mxu0 %v719
      %v934 = vpop.f32.mrf.mxu0
      %v935 = vadd.f32 %v634, %v934
      %v936 = vpop.f32.mrf.mxu0
      %937 = vmatprep.mubr.f32.mxu0 0.0
      %938 = vmatmul.mubr.f32.gmra.mxu0 %v722
      %v939 = vpop.f32.mrf.mxu0
      %v940 = vadd.f32 %v634, %v939
      %v941 = vpop.f32.mrf.mxu0
      %942 = vmatprep.mubr.f32.mxu0 0.0
      %943 = vmatmul.mubr.f32.gmra.mxu0 %v725
      %v944 = vpop.f32.mrf.mxu0
      %v945 = vadd.f32 %v634, %v944
      %v946 = vpop.f32.mrf.mxu0
      %947 = vmatprep.mubr.f32.mxu0 0.0
      %948 = vmatmul.mubr.f32.gmra.mxu0 %v728
      %v949 = vpop.f32.mrf.mxu0
      %v950 = vadd.f32 %v634, %v949
      %v951 = vpop.f32.mrf.mxu0
      %952 = vmatprep.mubr.f32.mxu0 0.0
      %953 = vmatmul.mubr.f32.gmra.mxu0 %v731
      %v954 = vpop.f32.mrf.mxu0
      %v955 = vadd.f32 %v634, %v954
      %v956 = vpop.f32.mrf.mxu0
      %957 = vdwg.mxu0
      %vm958 = vcmask 7168
      %959 = vst.msk [vmem:[%s228] sm:$0xff] %vm958, %v800
      %960 = vst.msk [vmem:[%s228 + $0x8] sm:$0xff] %vm958, %v805
      %961 = vst.msk [vmem:[%s228 + $0x10] sm:$0xff] %vm958, %v810
      %962 = vst.msk [vmem:[%s228 + $0x18] sm:$0xff] %vm958, %v815
      %963 = vst.msk [vmem:[%s228 + $0x20] sm:$0xff] %vm958, %v820
      %964 = vst.msk [vmem:[%s228 + $0x28] sm:$0xff] %vm958, %v825
      %965 = vst.msk [vmem:[%s228 + $0x30] sm:$0xff] %vm958, %v830
      %966 = vst.msk [vmem:[%s228 + $0x38] sm:$0xff] %vm958, %v835
      %967 = vst.msk [vmem:[%s228 + $0x40] sm:$0xff] %vm958, %v840
      %968 = vst.msk [vmem:[%s228 + $0x48] sm:$0xff] %vm958, %v845
      %969 = vst.msk [vmem:[%s228 + $0x50] sm:$0xff] %vm958, %v850
      %970 = vst.msk [vmem:[%s228 + $0x58] sm:$0xff] %vm958, %v855
      %971 = vst.msk [vmem:[%s228 + $0x60] sm:$0xff] %vm958, %v860
      %972 = vst.msk [vmem:[%s228 + $0x68] sm:$0xff] %vm958, %v865
      %973 = vst.msk [vmem:[%s228 + $0x70] sm:$0xff] %vm958, %v870
      %974 = vst.msk [vmem:[%s228 + $0x78] sm:$0xff] %vm958, %v875
      %975 = vst.msk [vmem:[%s228 + $0x80] sm:$0xff] %vm958, %v880
      %976 = vst.msk [vmem:[%s228 + $0x88] sm:$0xff] %vm958, %v885
      %977 = vst.msk [vmem:[%s228 + $0x90] sm:$0xff] %vm958, %v890
      %978 = vst.msk [vmem:[%s228 + $0x98] sm:$0xff] %vm958, %v895
      %979 = vst.msk [vmem:[%s228 + $0xa0] sm:$0xff] %vm958, %v900
      %980 = vst.msk [vmem:[%s228 + $0xa8] sm:$0xff] %vm958, %v905
      %981 = vst.msk [vmem:[%s228 + $0xb0] sm:$0xff] %vm958, %v910
      %982 = vst.msk [vmem:[%s228 + $0xb8] sm:$0xff] %vm958, %v915
      %983 = vst.msk [vmem:[%s228 + $0xc0] sm:$0xff] %vm958, %v920
      %984 = vst.msk [vmem:[%s228 + $0xc8] sm:$0xff] %vm958, %v925
      %985 = vst.msk [vmem:[%s228 + $0xd0] sm:$0xff] %vm958, %v930
      %986 = vst.msk [vmem:[%s228 + $0xd8] sm:$0xff] %vm958, %v935
      %987 = vst.msk [vmem:[%s228 + $0xe0] sm:$0xff] %vm958, %v940
      %988 = vst.msk [vmem:[%s228 + $0xe8] sm:$0xff] %vm958, %v945
      %989 = vst.msk [vmem:[%s228 + $0xf0] sm:$0xff] %vm958, %v950
      %990 = vst.msk [vmem:[%s228 + $0xf8] sm:$0xff] %vm958, %v955
      %s991 = smul.u32 32, %s18
      %p992 = scmp.lt.s32.totalorder %s991, 63
      %s993 = scalar_select %p992, %s991, 63
      %s994 = smul.addr %s993, 8
      %s995 = scalar_lea.vmem %s5, %s994
      // Predicated region
      $region41: #{tpu_custom_call.1} parent=39 // pred_check
        %p996 = pneg %p146
      $region42: #{tpu_custom_call.1} parent=39 // pred_check_branch
        %998 = sbr.rel (%p996) target = $region44
      $region43: #{tpu_custom_call.1} parent=39 // pred_region
        %s999 = smul.u32 32, %s18
      $region44: #{tpu_custom_call.1} parent=39 // pred_fallthru
        _
    $region40: #{tpu_custom_call.1} parent=5 // pred_fallthru
      _
    %p1000 = scmp.le.s32.totalorder 2, %s13
    // Predicated region
    $region45: #{tpu_custom_call.1} parent=5 // pred_check
      %p1001 = pneg %p1000
    $region46: #{tpu_custom_call.1} parent=5 // pred_check_branch
      %1003 = sbr.rel (%p1001) target = $region48
    $region47: #{tpu_custom_call.1} parent=5 // pred_region
      %s1004 = ssub.s32 %s13, 2
      // Predicated region
      $region49: #{tpu_custom_call.1} parent=47 // pred_check
        %p1005 = pneg %p152
      $region50: #{tpu_custom_call.1} parent=47 // pred_check_branch
        %1007 = sbr.rel (%p1005) target = $region52
      $region51: #{tpu_custom_call.1} parent=47 // pred_region
        %s1008 = smul.u32 32, %s19
        %p1009 = scmp.lt.s32.totalorder %s1008, 63
        %s1010 = scalar_select %p1009, %s1008, 63
        %s1011 = smul.addr %s1010, 8
        %s1012 = scalar_lea.vmem %s5, %s1011
      $region52: #{tpu_custom_call.1} parent=47 // pred_fallthru
        _
    $region48: #{tpu_custom_call.1} parent=5 // pred_fallthru
      _
  $region6: #{tpu_custom_call.1} parent=0 // loop_footer
    %s17 = sadd.s32 1, %s13
  $region7: #{tpu_custom_call.1} parent=0 // loop_footer_branch
    %12 = sbr.rel target = $region3
  $region8: #{tpu_custom_call.1} parent=0 // loop_exit
    _

</llo_original>
